<compile_context>
chip_gen: v7x
topology: tpu7x:2x2x1
jax: 0.10.0
libtpu: 0.0.40
codegen_flags: <defaults>
</compile_context>

<pallas_src>
import jax
import jax.numpy as jnp
from jax import lax
from jax.experimental import pallas as pl
from jax.experimental.pallas import tpu as pltpu


EPS = 1e-6

_POS_ROWS = 8   # sublane-aligned position table: [x, y, z, 1, 0, 0, 0, 0]
_ONES_ROW = 3   # row of ones -> column 3 of the matmul result is sum(f)

_TARGET_TILE_R = 256       # rows per block (batch*channel axis)
_TARGET_TILE_L_F32 = 8192  # f32 elements per contraction block (bf16 -> 2x)


def _round_up(x, m):
    return ((x + m - 1) // m) * m


def _vmem_per_step_bytes(tile_r, tile_l, itemsize):
    feat = 2 * tile_r * tile_l * itemsize                 # double-buffered stream
    cast = tile_r * tile_l * 4 if itemsize != 4 else 0    # in-kernel f32 upcast temp
    pos = 2 * _POS_ROWS * tile_l * 4                      # double-buffered f32 pos tile
    out = 2 * tile_r * _POS_ROWS * 4                      # resident output block
    return feat + cast + pos + out


def _vmem_capacity_bytes():
    try:
        cap = getattr(pltpu.get_tpu_info(), "vmem_capacity_bytes", None)
        if cap:
            return int(cap)
    except Exception:
        pass
    return 64 << 20   # conservative fallback: v7x per-TC physical VMEM


def _spatial_softmax3d_kernel(f_ref, pos_ref, out_ref):
    # f_ref:   (tile_r, tile_l)         feature block (any float dtype)
    # pos_ref: (_POS_ROWS, tile_l) f32  [pos_x, pos_y, pos_z, ones, 0, 0, 0, 0]
    # out_ref: (tile_r, _POS_ROWS) f32  resident accumulator / final result
    k = pl.program_id(1)

    @pl.when(k == 0)
    def _init():
        out_ref[...] = jnp.zeros_like(out_ref)

    f = f_ref[...]
    if f.dtype != jnp.float32:
        # Keep `pos` at full f32 precision; upcast the feature block instead
        # (VPU work, hidden under the HBM stream of this mem-bound kernel).
        f = f.astype(jnp.float32)

    # Single skinny MXU matmul per block, contracting the spatial axis of
    # both operands (f @ pos^T without a wrapper-side transpose; any pos-tile
    # relayout Mosaic inserts is 8 x tile_l and rides the free XLU slot).
    # The ones row of `pos` makes column 3 of the result the plain sum(f)
    # denominator, removing the separate cross-lane reduction.
    out_ref[...] += lax.dot_general(
        f, pos_ref[...],
        dimension_numbers=(((1,), (1,)), ((), ())),
        preferred_element_type=jnp.float32)

    @pl.when(k == pl.num_programs(1) - 1)
    def _finalize():
        acc = out_ref[...]
        denom = acc[:, _ONES_ROW:_ONES_ROW + 1] + EPS
        out_ref[...] = (acc / denom).astype(out_ref.dtype)


def make_position_buffers(height, width, depth,
                          lim=(0.0, 1.0, 0.0, 1.0, 0.0, 1.0)):
    """Deterministic reproduction of the PyTorch __init__ buffers: (3, L)."""
    ay = jnp.linspace(lim[0], lim[1], width)
    ax = jnp.linspace(lim[2], lim[3], height)
    az = jnp.linspace(lim[4], lim[5], depth)
    # np.meshgrid default indexing is 'xy' -> outputs of shape (H, W, D)
    pos_y, pos_x, pos_z = jnp.meshgrid(ay, ax, az, indexing="xy")
    L = height * width * depth
    return jnp.stack([pos_x.reshape(L), pos_y.reshape(L), pos_z.reshape(L)],
                     axis=0).astype(jnp.float32)        # (3, L), [x, y, z]


def spatial_softmax3d(feature, pos, *, channel, height, width, depth):
    """feature: (N, C, H, W, D) -> (keypoints (N, C, 3) f32, heatmap (N, C, H, W, D))."""
    N, C, H, W, D = feature.shape
    assert (C, H, W, D) == (channel, height, width, depth)
    R = N * C
    L = H * W * D

    f2 = feature.reshape(R, L)
    itemsize = jnp.dtype(f2.dtype).itemsize

    # --- VMEM budget per generation -------------------------------------
    vmem_cap = _vmem_capacity_bytes()
    # v5e/v6e (128 MiB physical): ask for 64 MiB scoped; v7x (64 MiB/TC): 48 MiB.
    vmem_limit = int(min(vmem_cap * 3 // 4, 64 << 20))
    vmem_budget = max(vmem_limit - (8 << 20), 8 << 20)   # compiler-scratch headroom

    # --- Tile selection ---------------------------------------------------
    # Row tile: up to 256 rows; force >= 2 row tiles whenever R > 8 so the
    # "parallel" row axis shards across both v7x TensorCores (megacore).
    tile_r = min(_TARGET_TILE_R, _round_up(R, 8))
    if R > 8:
        tile_r = min(tile_r, _round_up((R + 1) // 2, 8))
    r_pad = _round_up(R, tile_r)

    # L tile: dtype-aware target (same byte footprint for bf16 as f32),
    # shrunk until the double-buffered working set fits the VMEM budget.
    target_l = _TARGET_TILE_L_F32 * max(1, 4 // itemsize)
    tile_l = min(_round_up(L, 128), _round_up(target_l, 128))
    while tile_l > 128 and _vmem_per_step_bytes(tile_r, tile_l, itemsize) > vmem_budget:
        tile_l = _round_up(tile_l // 2, 128)
    l_pad = _round_up(L, tile_l)

    # Padding: every block is full; padded rows are zero so their keypoints
    # are 0 / eps = 0 and get sliced off below.
    if (r_pad, l_pad) != (R, L):
        f2 = jnp.pad(f2, ((0, r_pad - R), (0, l_pad - L)))

    # 8-row, sublane-aligned f32 position table: [x, y, z, 1, 0, 0, 0, 0].
    pos8 = jnp.concatenate(
        [pos.astype(jnp.float32),
         jnp.ones((1, L), jnp.float32),
         jnp.zeros((_POS_ROWS - 4, L), jnp.float32)], axis=0)
    if l_pad != L:
        pos8 = jnp.pad(pos8, ((0, 0), (0, l_pad - L)))

    grid = (r_pad // tile_r, l_pad // tile_l)

    cost = pl.CostEstimate(
        flops=2 * r_pad * l_pad * _POS_ROWS,
        transcendentals=0,
        bytes_accessed=int(r_pad * l_pad * itemsize                 # feature stream
                           + grid[0] * _POS_ROWS * l_pad * 4        # pos re-reads
                           + r_pad * _POS_ROWS * 4))                # output

    out = pl.pallas_call(
        _spatial_softmax3d_kernel,
        out_shape=jax.ShapeDtypeStruct((r_pad, _POS_ROWS), jnp.float32),
        grid=grid,
        in_specs=[
            pl.BlockSpec((tile_r, tile_l), lambda i, k: (i, k)),      # feature
            pl.BlockSpec((_POS_ROWS, tile_l), lambda i, k: (0, k)),   # pos table
        ],
        # Output block index is constant over k -> stays resident in VMEM
        # across the whole reduction (it *is* the accumulator).
        out_specs=pl.BlockSpec((tile_r, _POS_ROWS), lambda i, k: (i, 0)),
        compiler_params=pltpu.CompilerParams(
            dimension_semantics=("parallel", "arbitrary"),
            vmem_limit_bytes=vmem_limit),
        cost_estimate=cost,
    )(f2, pos8)

    feature_keypoints = out[:R, :3].reshape(-1, channel, 3)
    heatmap = feature.reshape(-1, channel, height, width, depth)
    return feature_keypoints, heatmap


def _reference(feature, pos, *, channel, height, width, depth):
    """Pure-JAX reference matching the PyTorch forward exactly."""
    R = feature.shape[0] * feature.shape[1]
    L = height * width * depth
    f2 = feature.reshape(R, L).astype(jnp.float32)
    denom = jnp.sum(f2, axis=1, keepdims=True) + EPS
    ex = jnp.sum(pos[0] * f2, axis=1, keepdims=True) / denom
    ey = jnp.sum(pos[1] * f2, axis=1, keepdims=True) / denom
    ez = jnp.sum(pos[2] * f2, axis=1, keepdims=True) / denom
    kp = jnp.concatenate([ex, ey, ez], axis=1).reshape(-1, channel, 3)
    hm = feature.reshape(-1, channel, height, width, depth)
    return kp, hm


if __name__ == "__main__":
    # Small shapes consistent with the module: N=2, C=4, H=W=D=8.
    N, C, H, W, D = 2, 4, 8, 8, 8
    key = jax.random.PRNGKey(0)
    feature = jax.random.uniform(key, (N, C, H, W, D), dtype=jnp.float32)

    pos = make_position_buffers(H, W, D)   # deterministic buffers (3, L)

    kp, hm = spatial_softmax3d(feature, pos, channel=C, height=H, width=W, depth=D)
    kp = jax.block_until_ready(kp)
    hm = jax.block_until_ready(hm)

    kp_ref, hm_ref = _reference(feature, pos, channel=C, height=H, width=W, depth=D)
    assert kp.shape == (N, C, 3) and hm.shape == (N, C, H, W, D)
    assert jnp.allclose(kp, kp_ref, atol=1e-5, rtol=1e-5)
    assert jnp.allclose(hm, hm_ref)

    print("KERNEL_OK")
</pallas_src>

<mosaic_0001>
module attributes {stable_mosaic.version = 11 : i64} {
  func.func @_spatial_softmax3d_kernel(%arg0: i32, %arg1: i32, %arg2: memref<8x512xf32, #tpu.memory_space<vmem>>, %arg3: memref<8x512xf32, #tpu.memory_space<vmem>>, %arg4: memref<8x8xf32, #tpu.memory_space<vmem>>) attributes {dimension_semantics = [#tpu.dimension_semantics<parallel>, #tpu.dimension_semantics<arbitrary>], iteration_bounds = array<i64: 1, 1>, scalar_prefetch = 0 : i64, scratch_operands = 0 : i64, tpu.core_type = #tpu.core_type<tc>, window_params = [{transform_indices = @transform_0, window_bounds = array<i64: 8, 512>}, {transform_indices = @transform_1, window_bounds = array<i64: 8, 512>}, {transform_indices = @transform_2, window_bounds = array<i64: 8, 8>}]} {
    %c0_i32 = arith.constant 0 : i32
    %0 = arith.cmpi eq, %arg1, %c0_i32 : i32
    %1 = arith.extui %0 : i1 to i32
    %c0_i32_0 = arith.constant 0 : i32
    %2 = arith.cmpi ne, %1, %c0_i32_0 : i32
    scf.if %2 {
      %cst_10 = arith.constant 0.000000e+00 : f32
      %12 = vector.broadcast %cst_10 : f32 to vector<8x8xf32>
      %c0_11 = arith.constant 0 : index
      %c0_12 = arith.constant 0 : index
      %13 = vector.load %arg4[%c0_11, %c0_12] : memref<8x8xf32, #tpu.memory_space<vmem>>, vector<8x8xf32>
      tpu.vector_store %arg4[%c0_11, %c0_12], %12 {strides = array<i32>} : memref<8x8xf32, #tpu.memory_space<vmem>>, vector<8x8xf32>,
    } else {
    }
    %c0 = arith.constant 0 : index
    %c0_1 = arith.constant 0 : index
    %3 = vector.load %arg2[%c0, %c0_1] : memref<8x512xf32, #tpu.memory_space<vmem>>, vector<8x512xf32>
    %c0_2 = arith.constant 0 : index
    %c0_3 = arith.constant 0 : index
    %4 = vector.load %arg4[%c0_2, %c0_3] : memref<8x8xf32, #tpu.memory_space<vmem>>, vector<8x8xf32>
    %c0_4 = arith.constant 0 : index
    %c0_5 = arith.constant 0 : index
    %5 = vector.load %arg3[%c0_4, %c0_5] : memref<8x512xf32, #tpu.memory_space<vmem>>, vector<8x512xf32>
    %cst = arith.constant dense<0.000000e+00> : vector<8x8xf32>
    %6 = tpu.matmul %3, %5, %cst {dimension_numbers = #tpu.dot_dimension_numbers<[1], [1], [0], [0], [0, 0, 1, 0], [], []>} : vector<8x512xf32>, vector<8x512xf32>, vector<8x8xf32> -> vector<8x8xf32>
    %7 = arith.addf %4, %6 : vector<8x8xf32>
    %c0_6 = arith.constant 0 : index
    %c0_7 = arith.constant 0 : index
    %8 = vector.load %arg4[%c0_6, %c0_7] : memref<8x8xf32, #tpu.memory_space<vmem>>, vector<8x8xf32>
    tpu.vector_store %arg4[%c0_6, %c0_7], %7 {strides = array<i32>} : memref<8x8xf32, #tpu.memory_space<vmem>>, vector<8x8xf32>,
    %c0_i32_8 = arith.constant 0 : i32
    %9 = arith.cmpi eq, %arg1, %c0_i32_8 : i32
    %10 = arith.extui %9 : i1 to i32
    %c0_i32_9 = arith.constant 0 : i32
    %11 = arith.cmpi ne, %10, %c0_i32_9 : i32
    scf.if %11 {
      %c0_10 = arith.constant 0 : index
      %c0_11 = arith.constant 0 : index
      %12 = vector.load %arg4[%c0_10, %c0_11] : memref<8x8xf32, #tpu.memory_space<vmem>>, vector<8x8xf32>
      %13 = vector.extract_strided_slice %12 {offsets = [0, 3], sizes = [8, 1], strides = [1, 1]} : vector<8x8xf32> to vector<8x1xf32>
      %cst_12 = arith.constant 9.99999997E-7 : f32
      %14 = vector.broadcast %cst_12 : f32 to vector<8x1xf32>
      %15 = arith.addf %13, %14 : vector<8x1xf32>
      %16 = vector.broadcast %15 : vector<8x1xf32> to vector<8x8xf32>
      %17 = arith.divf %12, %16 : vector<8x8xf32>
      %c0_13 = arith.constant 0 : index
      %c0_14 = arith.constant 0 : index
      %18 = vector.load %arg4[%c0_13, %c0_14] : memref<8x8xf32, #tpu.memory_space<vmem>>, vector<8x8xf32>
      tpu.vector_store %arg4[%c0_13, %c0_14], %17 {strides = array<i32>} : memref<8x8xf32, #tpu.memory_space<vmem>>, vector<8x8xf32>,
    } else {
    }
    return
  }
  func.func @transform_0(%arg0: i32, %arg1: i32) -> (i32, i32) {
    %c0_i32 = arith.constant 0 : i32
    return %arg0, %arg1 : i32, i32
  }
  func.func @transform_1(%arg0: i32, %arg1: i32) -> (i32, i32) {
    %c0_i32 = arith.constant 0 : i32
    %c0_i32_0 = arith.constant 0 : i32
    return %c0_i32, %arg1 : i32, i32
  }
  func.func @transform_2(%arg0: i32, %arg1: i32) -> (i32, i32) {
    %c0_i32 = arith.constant 0 : i32
    %c0_i32_0 = arith.constant 0 : i32
    return %arg0, %c0_i32 : i32, i32
  }
}

</mosaic_0001>

<llo_original>
// kernel: tpu_custom_call.1
$region0: #{tpu_custom_call.1}
  #allocation0 [shape = 'u32[]', space=smem, size = 0x4, offset = 0x4, fixed_abs, tag = 'smem constant byte address 0x4 - core index']
  #allocation1 [shape = 'u32[144,128]{1,0:T(1,128)}', space=vmem, size = 0x12000, scoped, tag = 'internal scratch']
  %s0 = inlined_call_operand.hbm [shape: f32[8,512], index: 0, kind: input, shape index: {}]
  %s1 = inlined_call_operand.hbm [shape: f32[8,512], index: 1, kind: input, shape index: {}]
  %s2 = inlined_call_operand.hbm [shape: f32[8,8], index: 2, kind: output, shape index: {}]
  %s3 = sld [smem:[#allocation0]]
  $region34: #{tpu_custom_call.1} parent=0
    _
  %s5 = ssub.s32 1, %s3
  %s6 = scalar_select 0, %s5, %s3
  $region1: #{tpu_custom_call.1} parent=0
    #allocation2 [shape = 'u8[16384]{0}', space=vmem, size = 0x4000, scoped, tag = 'input window, operand 0, single buffered']
    #allocation3 [shape = 's32[1]{0}', space=sflag, size = 0x4, scoped, tag = 'scoped memory for tpu_custom_call.1']
    #allocation4 [shape = 's32[1]{0}', space=sflag, size = 0x4, scoped, tag = 'scoped memory for tpu_custom_call.1']
    #allocation5 [shape = 'u8[16384]{0}', space=vmem, size = 0x4000, scoped, tag = 'input window, operand 1, single buffered']
    #allocation6 [shape = 's32[1]{0}', space=sflag, size = 0x4, scoped, tag = 'scoped memory for tpu_custom_call.1']
    #allocation7 [shape = 'u8[4096]{0}', space=vmem, size = 0x1000, scoped, tag = 'output window, operand 0, single buffered']
    %7 = vsyncpa [#allocation3], 0
    %8 = vsyncpa [#allocation6], 0
    %9 = vsyncpa [#allocation4], 0
    // Predicated region
    $region2: #{tpu_custom_call.1} parent=1 // pred_check
      _
    $region3: #{tpu_custom_call.1} parent=1 // pred_check_branch
      %11 = sbr.rel (0) target = $region5
    $region4: #{tpu_custom_call.1} parent=1 // pred_region
      %s13 = ssub.s32 512, 512
      %14 = vsyncadd [#allocation3], %s13
      %s16 = sshll.u32 [#allocation2], 4
      %s17 = int_to_ptr.vmem [resolvable:$true] %s16
      %19 = dma.hbm_to_vmem [thread:$0]  %s0, 512, %s17, [#allocation3]
    $region5: #{tpu_custom_call.1} parent=1 // pred_fallthru
      _
    // Predicated region
    $region6: #{tpu_custom_call.1} parent=1 // pred_check
      _
    $region7: #{tpu_custom_call.1} parent=1 // pred_check_branch
      %21 = sbr.rel (0) target = $region9
    $region8: #{tpu_custom_call.1} parent=1 // pred_region
      %s23 = ssub.s32 512, 512
      %24 = vsyncadd [#allocation6], %s23
      %s26 = sshll.u32 [#allocation5], 4
      %s27 = int_to_ptr.vmem [resolvable:$true] %s26
      %29 = dma.hbm_to_vmem [thread:$0]  %s1, 512, %s27, [#allocation6]
    $region9: #{tpu_custom_call.1} parent=1 // pred_fallthru
      _
    // Predicated region
    $region10: #{tpu_custom_call.1} parent=1 // pred_check
      _
    $region11: #{tpu_custom_call.1} parent=1 // pred_check_branch
      %31 = sbr.rel (0) target = $region13
    $region12: #{tpu_custom_call.1} parent=1 // pred_region
      %32 = dma.done [#allocation3], 512
    $region13: #{tpu_custom_call.1} parent=1 // pred_fallthru
      _
    // Predicated region
    $region14: #{tpu_custom_call.1} parent=1 // pred_check
      _
    $region15: #{tpu_custom_call.1} parent=1 // pred_check_branch
      %34 = sbr.rel (0) target = $region17
    $region16: #{tpu_custom_call.1} parent=1 // pred_region
      %35 = dma.done [#allocation6], 512
    $region17: #{tpu_custom_call.1} parent=1 // pred_fallthru
      _
    %p36 = scmp.eq.s32.totalorder 0, 0
    // Predicated region
    $region18: #{tpu_custom_call.1} parent=1 // pred_check
      %p37 = pneg %p36
    $region19: #{tpu_custom_call.1} parent=1 // pred_check_branch
      %39 = sbr.rel (%p37) target = $region21
    $region20: #{tpu_custom_call.1} parent=1 // pred_region
      %vm40 = vcmask 64512
      %41 = vst.msk [vmem:[#allocation7] sm:$0xff] %vm40, 0.0
    $region21: #{tpu_custom_call.1} parent=1 // pred_fallthru
      _
    %v42 = vld [vmem:[#allocation2] sm:$0xff]
    %v43 = vld [vmem:[#allocation2 + $0x8] sm:$0xff]
    %v44 = vld [vmem:[#allocation2 + $0x10] sm:$0xff]
    %v45 = vld [vmem:[#allocation2 + $0x18] sm:$0xff]
    %v46 = vld [vmem:[#allocation7] sm:$0xff]
    %v47 = vld [vmem:[#allocation5] sm:$0xff]
    %v48 = vld [vmem:[#allocation5 + $0x8] sm:$0xff]
    %v49 = vld [vmem:[#allocation5 + $0x10] sm:$0xff]
    %v50 = vld [vmem:[#allocation5 + $0x18] sm:$0xff]
    %51 = vmatprep.subr.mxu0 %v48
    %52 = vmatpush1.xpose.msra.mxu0 %v47
    %53 = vmatprep.subr.mxu0 0.0
    %54 = vmatpush1.xpose.msra.mxu0 0.0
    %55 = vmatprep.subr.mxu0 0.0
    %56 = vmatpush1.xpose.msra.mxu0 0.0
    %57 = vmatprep.subr.mxu0 0.0
    %58 = vmatpush1.xpose.msra.mxu0 0.0
    %59 = vmatprep.subr.mxu0 0.0
    %60 = vmatpush1.xpose.msra.mxu0 0.0
    %61 = vmatprep.subr.mxu0 0.0
    %62 = vmatpush1.xpose.msra.mxu0 0.0
    %63 = vmatprep.subr.mxu0 0.0
    %64 = vmatpush1.xpose.msra.mxu0 0.0
    %65 = vmatprep.subr.mxu0 0.0
    %66 = vmatpush1.xpose.msra.mxu0 0.0
    %67 = vmatprep.subr.mxu0 0.0
    %68 = vmatpush1.xpose.msra.mxu0 0.0
    %69 = vmatprep.subr.mxu0 0.0
    %70 = vmatpush1.xpose.msra.mxu0 0.0
    %71 = vmatprep.subr.mxu0 0.0
    %72 = vmatpush1.xpose.msra.mxu0 0.0
    %73 = vmatprep.subr.mxu0 0.0
    %74 = vmatpush1.xpose.msra.mxu0 0.0
    %75 = vmatprep.subr.mxu0 0.0
    %76 = vmatpush1.xpose.msra.mxu0 0.0
    %77 = vmatprep.subr.mxu0 0.0
    %78 = vmatpush1.xpose.msra.mxu0 0.0
    %79 = vmatprep.subr.mxu0 0.0
    %80 = vmatpush1.xpose.msra.mxu0 0.0
    %81 = vmatprep.subr.mxu0 0.0
    %82 = vmatpush1.xpose.msra.mxu0 0.0
    %83 = vmatprep.subr.mxu0 0.0
    %84 = vmatpush1.xpose.msra.mxu0 0.0
    %85 = vmatprep.subr.mxu0 0.0
    %86 = vmatpush1.xpose.msra.mxu0 0.0
    %87 = vmatprep.subr.mxu0 0.0
    %88 = vmatpush1.xpose.msra.mxu0 0.0
    %89 = vmatprep.subr.mxu0 0.0
    %90 = vmatpush1.xpose.msra.mxu0 0.0
    %91 = vmatprep.subr.mxu0 0.0
    %92 = vmatpush1.xpose.msra.mxu0 0.0
    %93 = vmatprep.subr.mxu0 0.0
    %94 = vmatpush1.xpose.msra.mxu0 0.0
    %95 = vmatprep.subr.mxu0 0.0
    %96 = vmatpush1.xpose.msra.mxu0 0.0
    %97 = vmatprep.subr.mxu0 0.0
    %98 = vmatpush1.xpose.msra.mxu0 0.0
    %99 = vmatprep.subr.mxu0 0.0
    %100 = vmatpush1.xpose.msra.mxu0 0.0
    %101 = vmatprep.subr.mxu0 0.0
    %102 = vmatpush1.xpose.msra.mxu0 0.0
    %103 = vmatprep.subr.mxu0 0.0
    %104 = vmatpush1.xpose.msra.mxu0 0.0
    %105 = vmatprep.subr.mxu0 0.0
    %106 = vmatpush1.xpose.msra.mxu0 0.0
    %107 = vmatprep.subr.mxu0 0.0
    %108 = vmatpush1.xpose.msra.mxu0 0.0
    %109 = vmatprep.subr.mxu0 0.0
    %110 = vmatpush1.xpose.msra.mxu0 0.0
    %111 = vmatprep.subr.mxu0 0.0
    %112 = vmatpush1.xpose.msra.mxu0 0.0
    %113 = vmatprep.subr.mxu0 0.0
    %114 = vmatpush1.xpose.msra.mxu0 0.0
    %115 = vmatprep.mubr.f32.mxu0 %v43
    %116 = vmatmul.mubr.f32.gmra.mrb[0].mxu0 %v42
    %v117 = vpop.f32.mrb[0].mxu0
    %v118 = vadd.f32 0.0, %v117
    %v119 = vpop.f32.mrb[0].mxu0
    %120 = vdwg.mxu0
    %121 = vmatprep.subr.mxu0 %v50
    %122 = vmatpush1.xpose.msra.mxu0 %v49
    %123 = vmatprep.subr.mxu0 0.0
    %124 = vmatpush1.xpose.msra.mxu0 0.0
    %125 = vmatprep.subr.mxu0 0.0
    %126 = vmatpush1.xpose.msra.mxu0 0.0
    %127 = vmatprep.subr.mxu0 0.0
    %128 = vmatpush1.xpose.msra.mxu0 0.0
    %129 = vmatprep.subr.mxu0 0.0
    %130 = vmatpush1.xpose.msra.mxu0 0.0
    %131 = vmatprep.subr.mxu0 0.0
    %132 = vmatpush1.xpose.msra.mxu0 0.0
    %133 = vmatprep.subr.mxu0 0.0
    %134 = vmatpush1.xpose.msra.mxu0 0.0
    %135 = vmatprep.subr.mxu0 0.0
    %136 = vmatpush1.xpose.msra.mxu0 0.0
    %137 = vmatprep.subr.mxu0 0.0
    %138 = vmatpush1.xpose.msra.mxu0 0.0
    %139 = vmatprep.subr.mxu0 0.0
    %140 = vmatpush1.xpose.msra.mxu0 0.0
    %141 = vmatprep.subr.mxu0 0.0
    %142 = vmatpush1.xpose.msra.mxu0 0.0
    %143 = vmatprep.subr.mxu0 0.0
    %144 = vmatpush1.xpose.msra.mxu0 0.0
    %145 = vmatprep.subr.mxu0 0.0
    %146 = vmatpush1.xpose.msra.mxu0 0.0
    %147 = vmatprep.subr.mxu0 0.0
    %148 = vmatpush1.xpose.msra.mxu0 0.0
    %149 = vmatprep.subr.mxu0 0.0
    %150 = vmatpush1.xpose.msra.mxu0 0.0
    %151 = vmatprep.subr.mxu0 0.0
    %152 = vmatpush1.xpose.msra.mxu0 0.0
    %153 = vmatprep.subr.mxu0 0.0
    %154 = vmatpush1.xpose.msra.mxu0 0.0
    %155 = vmatprep.subr.mxu0 0.0
    %156 = vmatpush1.xpose.msra.mxu0 0.0
    %157 = vmatprep.subr.mxu0 0.0
    %158 = vmatpush1.xpose.msra.mxu0 0.0
    %159 = vmatprep.subr.mxu0 0.0
    %160 = vmatpush1.xpose.msra.mxu0 0.0
    %161 = vmatprep.subr.mxu0 0.0
    %162 = vmatpush1.xpose.msra.mxu0 0.0
    %163 = vmatprep.subr.mxu0 0.0
    %164 = vmatpush1.xpose.msra.mxu0 0.0
    %165 = vmatprep.subr.mxu0 0.0
    %166 = vmatpush1.xpose.msra.mxu0 0.0
    %167 = vmatprep.subr.mxu0 0.0
    %168 = vmatpush1.xpose.msra.mxu0 0.0
    %169 = vmatprep.subr.mxu0 0.0
    %170 = vmatpush1.xpose.msra.mxu0 0.0
    %171 = vmatprep.subr.mxu0 0.0
    %172 = vmatpush1.xpose.msra.mxu0 0.0
    %173 = vmatprep.subr.mxu0 0.0
    %174 = vmatpush1.xpose.msra.mxu0 0.0
    %175 = vmatprep.subr.mxu0 0.0
    %176 = vmatpush1.xpose.msra.mxu0 0.0
    %177 = vmatprep.subr.mxu0 0.0
    %178 = vmatpush1.xpose.msra.mxu0 0.0
    %179 = vmatprep.subr.mxu0 0.0
    %180 = vmatpush1.xpose.msra.mxu0 0.0
    %181 = vmatprep.subr.mxu0 0.0
    %182 = vmatpush1.xpose.msra.mxu0 0.0
    %183 = vmatprep.subr.mxu0 0.0
    %184 = vmatpush1.xpose.msra.mxu0 0.0
    %185 = vmatprep.mubr.f32.mxu0 %v45
    %186 = vmatmul.mubr.f32.gmra.mrb[0].mxu0 %v44
    %v187 = vpop.f32.mrb[0].mxu0
    %v188 = vadd.f32 %v118, %v187
    %v189 = vpop.f32.mrb[0].mxu0
    %190 = vdwg.mxu0
    %v191 = vadd.f32 %v46, %v188
    %vm192 = vcmask 64512
    %193 = vst.msk [vmem:[#allocation7] sm:$0xff] %vm192, %v191
    // Predicated region
    $region22: #{tpu_custom_call.1} parent=1 // pred_check
      %p194 = pneg %p36
    $region23: #{tpu_custom_call.1} parent=1 // pred_check_branch
      %196 = sbr.rel (%p194) target = $region25
    $region24: #{tpu_custom_call.1} parent=1 // pred_region
      %v197 = vld [vmem:[#allocation7] sm:$0xff]
      %v198 = vadd.f32 %v197, 1e-06
      %200 = vset.pattern.permute.xlu0 3
      %201 = vperm.xlu0 %200, %v198
      %v202 = vpop.permute.xlu0 %201
      %v204 = vrcp.pop %v202
      %v205 = vmul.f32 %v197, %v204
      %206 = vst.msk [vmem:[#allocation7] sm:$0xff] %vm192, %v205
    $region25: #{tpu_custom_call.1} parent=1 // pred_fallthru
      _
    // Predicated region
    $region26: #{tpu_custom_call.1} parent=1 // pred_check
      _
    $region27: #{tpu_custom_call.1} parent=1 // pred_check_branch
      %208 = sbr.rel (0) target = $region29
    $region28: #{tpu_custom_call.1} parent=1 // pred_region
      %s210 = ssub.s32 128, 128
      %211 = vsyncadd [#allocation4], %s210
      %s213 = sshll.u32 [#allocation7], 4
      %s214 = int_to_ptr.vmem [resolvable:$true] %s213
      %216 = dma.vmem_to_hbm [thread:$0]  %s214, 128, %s2, [#allocation4]
    $region29: #{tpu_custom_call.1} parent=1 // pred_fallthru
      _
    // Predicated region
    $region30: #{tpu_custom_call.1} parent=1 // pred_check
      _
    $region31: #{tpu_custom_call.1} parent=1 // pred_check_branch
      %218 = sbr.rel (0) target = $region33
    $region32: #{tpu_custom_call.1} parent=1 // pred_region
      %219 = dma.done [#allocation4], 128
    $region33: #{tpu_custom_call.1} parent=1 // pred_fallthru
      _
    %220 = vsyncpa [#allocation3], 1
    %221 = vsyncpa [#allocation6], 1
    %222 = vsyncpa [#allocation4], 1

</llo_original>
